<compile_context>
chip_gen: v5e
topology: v5e:2x2
jax: 0.10.0
libtpu: 0.0.40
codegen_flags: <defaults>
</compile_context>

<pallas_src>
import functools

import jax
import jax.numpy as jnp
from jax.experimental import pallas as pl
from jax.experimental.pallas import tpu as pltpu


def _round_up(n, m):
    return ((n + m - 1) // m) * m


def _vmem_capacity_bytes():
    """Physical VMEM per TensorCore (128 MiB on v5e/v6e, 64 MiB on v7x)."""
    try:
        return int(pltpu.get_tpu_info().vmem_capacity_bytes)
    except Exception:
        return 64 * 1024 * 1024  # conservative fallback = v7x per-core VMEM


def _footprint_bytes(tm, tk, dp, w_item, x_item):
    """Rough per-step VMEM footprint (weights budgeted at 2 pipeline buffers each)."""
    return (2 * 2 * dp * tk * w_item          # W1^T and W2^T panels, 2 buffers each
            + 2 * 2 * (tk + dp) * 4           # biases
            + 2 * tm * dp * x_item            # x row tile (double-buffered)
            + 2 * tm * dp * x_item            # out tile (double-buffered)
            + tm * dp * 4                     # f32 accumulator scratch
            + (2 * tm * tk + 3 * tm * dp) * 4)  # in-kernel f32 temporaries


def _choose_tiles(B, dp, w_item, x_item, vmem_cap):
    """Pick (TM rows, TK hidden-dim panel) from the batch, padded width and VMEM."""
    budget = (3 * vmem_cap) // 4  # headroom for Mosaic-internal scratch

    # Row tile: as large as the f32 temporaries allow, but keep >= 2 grid steps when
    # the batch allows (so the 'parallel' row axis can use both v7x TensorCores), and
    # round to the 8-sublane granule.
    if dp <= 1024:
        tm = 1024
    elif dp <= 2048:
        tm = 512
    else:
        tm = 256
    if B > 8:
        tm = min(tm, _round_up(-(-B // 2), 8))
    tm = max(8, min(tm, _round_up(B, 8)))

    # Hidden-dim panel: keep both weights fully resident (tk == dp) when they fit the
    # budget; otherwise stream TK-wide panels (multiples of 256 preferred for the
    # 256x256 MXU on v6e/v7x, 128 as a last resort).
    tk_candidates = [dp] + [t for t in (2048, 1024, 512, 256, 128)
                            if t < dp and dp % t == 0]
    for tk in tk_candidates:
        if _footprint_bytes(tm, tk, dp, w_item, x_item) <= budget:
            return tm, tk
    tk = tk_candidates[-1]
    while tm > 8 and _footprint_bytes(tm, tk, dp, w_item, x_item) > budget:
        tm = max(8, _round_up(tm // 2, 8))
    # TODO(synk): if even (tm=8, tk=128) overflows (enormous Dp), also tile x's
    # feature axis / W1's contraction axis.
    return tm, tk


def _residual_block_kernel(x_ref, w1_ref, b1_ref, w2_ref, b2_ref, o_ref, acc_ref):
    """Grid = (row tiles i, hidden-dim panels k); acc holds x + b2 + sum_k h_k@W2^T_k."""
    k = pl.program_id(1)
    cdt = w1_ref.dtype                            # MXU compute dtype (bf16 or f32)

    @pl.when(k == 0)
    def _init():
        # Residual + second-layer bias seed the f32 accumulator.
        acc_ref[...] = x_ref[...].astype(jnp.float32) + b2_ref[...]

    # First linear layer restricted to this hidden panel, f32 accumulation.
    h = jnp.dot(x_ref[...].astype(cdt), w1_ref[...],
                preferred_element_type=jnp.float32)
    h = h + b1_ref[...]
    # LeakyReLU (PyTorch default negative_slope = 0.01), elementwise -> per-panel OK.
    h = jnp.where(h >= 0.0, h, 0.01 * h)
    # Second linear layer: accumulate this panel's contribution in f32.
    acc_ref[...] += jnp.dot(h.astype(cdt), w2_ref[...],
                            preferred_element_type=jnp.float32)

    @pl.when(k == pl.num_programs(1) - 1)
    def _finalize():
        o_ref[...] = acc_ref[...].astype(o_ref.dtype)


def prepare_params(w1, b1, w2, b2, *, compute_dtype=jnp.bfloat16):
    """One-time parameter prep (outside the hot path).

    Transposes PyTorch-style (out, in) weights to (in, out), casts weights to the MXU
    compute dtype, keeps biases in f32, zero-pads features to a multiple of 128 lanes.
    """
    d = w1.shape[0]
    dp = _round_up(d, 128)
    pad = dp - d

    def prep_w(w):
        wt = jnp.asarray(w, jnp.float32).T        # (in, out) so the kernel does x @ W^T
        wt = jnp.pad(wt, ((0, pad), (0, pad)))
        return wt.astype(compute_dtype)

    def prep_b(b):
        b = jnp.asarray(b, jnp.float32).reshape(1, d)
        return jnp.pad(b, ((0, 0), (0, pad)))

    return prep_w(w1), prep_b(b1), prep_w(w2), prep_b(b2)


@functools.partial(jax.jit, static_argnames=("out_dtype", "_tm", "_tk"))
def residual_block(x, params, *, out_dtype=None, _tm=None, _tk=None):
    """x: (B, D); params: output of prepare_params(). _tm/_tk are test-only overrides."""
    w1t, b1, w2t, b2 = params
    B, D = x.shape
    Dp = w1t.shape[0]
    out_dt = jnp.dtype(out_dtype) if out_dtype is not None else x.dtype

    # Feature padding only when D is not lane-aligned; the batch axis is never padded
    # (ragged last row tile is handled by Pallas; OOB rows never reach HBM).
    x_p = x if Dp == D else jnp.pad(x, ((0, 0), (0, Dp - D)))

    w_item = jnp.dtype(w1t.dtype).itemsize
    x_item = jnp.dtype(x.dtype).itemsize
    vmem_cap = _vmem_capacity_bytes()
    TM, TK = _choose_tiles(B, Dp, w_item, x_item, vmem_cap)
    if _tm is not None:
        TM = _tm
    if _tk is not None:
        TK = _tk

    est = _footprint_bytes(TM, TK, Dp, w_item, x_item)
    vmem_limit = int(min(max(est * 5 // 4, 32 * 1024 * 1024), (vmem_cap * 9) // 10))

    grid = (pl.cdiv(B, TM), Dp // TK)

    out = pl.pallas_call(
        _residual_block_kernel,
        out_shape=jax.ShapeDtypeStruct((B, Dp), out_dt),
        grid=grid,
        in_specs=[
            pl.BlockSpec((TM, Dp), lambda i, k: (i, 0)),   # x row tile (full width)
            pl.BlockSpec((Dp, TK), lambda i, k: (0, k)),   # W1^T hidden panel
            pl.BlockSpec((1, TK), lambda i, k: (0, k)),    # b1 panel
            pl.BlockSpec((TK, Dp), lambda i, k: (k, 0)),   # W2^T hidden panel
            pl.BlockSpec((1, Dp), lambda i, k: (0, 0)),    # b2 (grid-invariant)
        ],
        out_specs=pl.BlockSpec((TM, Dp), lambda i, k: (i, 0)),
        scratch_shapes=[pltpu.VMEM((TM, Dp), jnp.float32)],   # f32 accumulator
        compiler_params=pltpu.CompilerParams(
            dimension_semantics=("parallel", "arbitrary"),
            vmem_limit_bytes=vmem_limit,
        ),
    )(x_p, w1t, b1, w2t, b2)

    return out if Dp == D else out[:, :D]


def residual_block_ref(x, w1, b1, w2, b2, compute_dtype=None):
    """Pure-JAX reference mirroring the PyTorch forward (optionally at bf16 precision)."""
    xf = jnp.asarray(x, jnp.float32)
    w1f = jnp.asarray(w1, jnp.float32)
    w2f = jnp.asarray(w2, jnp.float32)
    cdt = compute_dtype if compute_dtype is not None else jnp.float32
    h = jnp.dot(xf.astype(cdt), w1f.astype(cdt).T,
                preferred_element_type=jnp.float32) + b1
    h = jnp.where(h >= 0.0, h, 0.01 * h)
    y = jnp.dot(h.astype(cdt), w2f.astype(cdt).T,
                preferred_element_type=jnp.float32) + b2
    return xf + y


def _make_case(key, B, D):
    kx, k1w, k1b, k2w, k2b = jax.random.split(key, 5)
    bound = 1.0 / (D ** 0.5)
    x = jax.random.normal(kx, (B, D), dtype=jnp.float32)
    w1 = jax.random.uniform(k1w, (D, D), jnp.float32, -bound, bound)
    b1 = jax.random.uniform(k1b, (D,), jnp.float32, -bound, bound)
    w2 = jax.random.uniform(k2w, (D, D), jnp.float32, -bound, bound)
    b2 = jax.random.uniform(k2b, (D,), jnp.float32, -bound, bound)
    return x, w1, b1, w2, b2


if __name__ == "__main__":
    key = jax.random.PRNGKey(0)
    k1, k2 = jax.random.split(key)

    # --- Case 1: module-sized demo (batch=8, input_dim=32; features lane-padded to
    #     128 internally). Resident-weights path, grid = (1, 1). ---
    x, w1, b1, w2, b2 = _make_case(k1, B=8, D=32)

    params_f32 = prepare_params(w1, b1, w2, b2, compute_dtype=jnp.float32)
    out_f32 = jax.block_until_ready(residual_block(x, params_f32))
    ref_f32 = residual_block_ref(x, w1, b1, w2, b2)
    assert out_f32.shape == (8, 32)
    assert jnp.allclose(out_f32, ref_f32, atol=1e-5, rtol=1e-5), "case1 f32 mismatch"

    params_bf16 = prepare_params(w1, b1, w2, b2, compute_dtype=jnp.bfloat16)
    out_bf16 = jax.block_until_ready(residual_block(x, params_bf16))
    ref_bf16 = residual_block_ref(x, w1, b1, w2, b2, compute_dtype=jnp.bfloat16)
    assert jnp.allclose(out_bf16, ref_bf16, atol=2e-3, rtol=2e-3), "case1 bf16 mismatch"
    assert jnp.allclose(out_bf16, ref_f32, atol=1e-1, rtol=1e-1), "case1 bf16 drift"

    # Optional bf16 output (HBM write-traffic saver when the caller tolerates it).
    out_b16o = jax.block_until_ready(
        residual_block(x, params_bf16, out_dtype=jnp.bfloat16))
    assert out_b16o.dtype == jnp.bfloat16 and out_b16o.shape == (8, 32)
    assert jnp.allclose(out_b16o.astype(jnp.float32), ref_bf16, atol=5e-2, rtol=5e-2)

    # --- Case 2: ragged batch (B=12 with TM=8 -> masked last row tile) plus a forced
    #     hidden-dim-panel path (D=256 with TK=128 -> 2 k-steps), exercising the
    #     large-Dp / v7x structure at a small size. ---
    x2, w1_2, b1_2, w2_2, b2_2 = _make_case(k2, B=12, D=256)

    p2_f32 = prepare_params(w1_2, b1_2, w2_2, b2_2, compute_dtype=jnp.float32)
    out2_f32 = jax.block_until_ready(residual_block(x2, p2_f32, _tm=8, _tk=128))
    ref2_f32 = residual_block_ref(x2, w1_2, b1_2, w2_2, b2_2)
    assert out2_f32.shape == (12, 256)
    assert jnp.allclose(out2_f32, ref2_f32, atol=1e-4, rtol=1e-4), "case2 f32 mismatch"

    p2_bf16 = prepare_params(w1_2, b1_2, w2_2, b2_2)
    out2_bf16 = jax.block_until_ready(residual_block(x2, p2_bf16, _tm=8, _tk=128))
    ref2_bf16 = residual_block_ref(x2, w1_2, b1_2, w2_2, b2_2,
                                   compute_dtype=jnp.bfloat16)
    assert jnp.allclose(out2_bf16, ref2_bf16, atol=2e-3, rtol=2e-3), "case2 bf16 mismatch"

    print("KERNEL_OK")
</pallas_src>

<mosaic_0001>
module attributes {stable_mosaic.version = 11 : i64} {
  func.func @_residual_block_kernel(%arg0: i32, %arg1: i32, %arg2: memref<8x128xf32, #tpu.memory_space<vmem>>, %arg3: memref<128x128xf32, #tpu.memory_space<vmem>>, %arg4: memref<1x128xf32, #tpu.memory_space<vmem>>, %arg5: memref<128x128xf32, #tpu.memory_space<vmem>>, %arg6: memref<1x128xf32, #tpu.memory_space<vmem>>, %arg7: memref<8x128xf32, #tpu.memory_space<vmem>>, %arg8: memref<8x128xf32, #tpu.memory_space<vmem>>) attributes {dimension_semantics = [#tpu.dimension_semantics<parallel>, #tpu.dimension_semantics<arbitrary>], iteration_bounds = array<i64: 1, 1>, scalar_prefetch = 0 : i64, scratch_operands = 1 : i64, tpu.core_type = #tpu.core_type<tc>, window_params = [{transform_indices = @transform_0, window_bounds = array<i64: 8, 128>}, {transform_indices = @transform_1, window_bounds = array<i64: 128, 128>}, {transform_indices = @transform_2, window_bounds = array<i64: 1, 128>}, {transform_indices = @transform_3, window_bounds = array<i64: 128, 128>}, {pipeline_mode = #tpu.pipeline_mode<synchronous>, transform_indices = @transform_4, window_bounds = array<i64: 1, 128>}, {transform_indices = @transform_5, window_bounds = array<i64: 8, 128>}]} {
    %c0_i32 = arith.constant 0 : i32
    %0 = arith.cmpi eq, %arg1, %c0_i32 : i32
    %1 = arith.extui %0 : i1 to i32
    %c0_i32_0 = arith.constant 0 : i32
    %2 = arith.cmpi ne, %1, %c0_i32_0 : i32
    scf.if %2 {
      %c0_17 = arith.constant 0 : index
      %c0_18 = arith.constant 0 : index
      %22 = vector.load %arg2[%c0_17, %c0_18] : memref<8x128xf32, #tpu.memory_space<vmem>>, vector<8x128xf32>
      %c0_19 = arith.constant 0 : index
      %c0_20 = arith.constant 0 : index
      %23 = vector.load %arg6[%c0_19, %c0_20] : memref<1x128xf32, #tpu.memory_space<vmem>>, vector<1x128xf32>
      %24 = vector.broadcast %23 : vector<1x128xf32> to vector<8x128xf32>
      %25 = arith.addf %22, %24 : vector<8x128xf32>
      %c0_21 = arith.constant 0 : index
      %c0_22 = arith.constant 0 : index
      %26 = vector.load %arg8[%c0_21, %c0_22] : memref<8x128xf32, #tpu.memory_space<vmem>>, vector<8x128xf32>
      tpu.vector_store %arg8[%c0_21, %c0_22], %25 {strides = array<i32>} : memref<8x128xf32, #tpu.memory_space<vmem>>, vector<8x128xf32>,
    } else {
    }
    %c0 = arith.constant 0 : index
    %c0_1 = arith.constant 0 : index
    %3 = vector.load %arg2[%c0, %c0_1] : memref<8x128xf32, #tpu.memory_space<vmem>>, vector<8x128xf32>
    %c0_2 = arith.constant 0 : index
    %c0_3 = arith.constant 0 : index
    %4 = vector.load %arg3[%c0_2, %c0_3] : memref<128x128xf32, #tpu.memory_space<vmem>>, vector<128x128xf32>
    %cst = arith.constant dense<0.000000e+00> : vector<8x128xf32>
    %5 = tpu.matmul %3, %4, %cst {dimension_numbers = #tpu.dot_dimension_numbers<[1], [0], [0], [1], [0, 0, 1, 1], [], []>} : vector<8x128xf32>, vector<128x128xf32>, vector<8x128xf32> -> vector<8x128xf32>
    %c0_4 = arith.constant 0 : index
    %c0_5 = arith.constant 0 : index
    %6 = vector.load %arg4[%c0_4, %c0_5] : memref<1x128xf32, #tpu.memory_space<vmem>>, vector<1x128xf32>
    %7 = vector.broadcast %6 : vector<1x128xf32> to vector<8x128xf32>
    %8 = arith.addf %5, %7 : vector<8x128xf32>
    %cst_6 = arith.constant 0.000000e+00 : f32
    %9 = vector.broadcast %cst_6 : f32 to vector<8x128xf32>
    %10 = arith.cmpf oge, %8, %9 : vector<8x128xf32>
    %cst_7 = arith.constant 0.00999999977 : f32
    %11 = vector.broadcast %cst_7 : f32 to vector<8x128xf32>
    %12 = arith.mulf %11, %8 : vector<8x128xf32>
    %13 = arith.select %10, %8, %12 : vector<8x128xi1>, vector<8x128xf32>
    %c0_8 = arith.constant 0 : index
    %c0_9 = arith.constant 0 : index
    %14 = vector.load %arg8[%c0_8, %c0_9] : memref<8x128xf32, #tpu.memory_space<vmem>>, vector<8x128xf32>
    %c0_10 = arith.constant 0 : index
    %c0_11 = arith.constant 0 : index
    %15 = vector.load %arg5[%c0_10, %c0_11] : memref<128x128xf32, #tpu.memory_space<vmem>>, vector<128x128xf32>
    %cst_12 = arith.constant dense<0.000000e+00> : vector<8x128xf32>
    %16 = tpu.matmul %13, %15, %cst_12 {dimension_numbers = #tpu.dot_dimension_numbers<[1], [0], [0], [1], [0, 0, 1, 1], [], []>} : vector<8x128xf32>, vector<128x128xf32>, vector<8x128xf32> -> vector<8x128xf32>
    %17 = arith.addf %14, %16 : vector<8x128xf32>
    %c0_13 = arith.constant 0 : index
    %c0_14 = arith.constant 0 : index
    %18 = vector.load %arg8[%c0_13, %c0_14] : memref<8x128xf32, #tpu.memory_space<vmem>>, vector<8x128xf32>
    tpu.vector_store %arg8[%c0_13, %c0_14], %17 {strides = array<i32>} : memref<8x128xf32, #tpu.memory_space<vmem>>, vector<8x128xf32>,
    %c0_i32_15 = arith.constant 0 : i32
    %19 = arith.cmpi eq, %arg1, %c0_i32_15 : i32
    %20 = arith.extui %19 : i1 to i32
    %c0_i32_16 = arith.constant 0 : i32
    %21 = arith.cmpi ne, %20, %c0_i32_16 : i32
    scf.if %21 {
      %c0_17 = arith.constant 0 : index
      %c0_18 = arith.constant 0 : index
      %22 = vector.load %arg8[%c0_17, %c0_18] : memref<8x128xf32, #tpu.memory_space<vmem>>, vector<8x128xf32>
      %c0_19 = arith.constant 0 : index
      %c0_20 = arith.constant 0 : index
      %23 = vector.load %arg7[%c0_19, %c0_20] : memref<8x128xf32, #tpu.memory_space<vmem>>, vector<8x128xf32>
      tpu.vector_store %arg7[%c0_19, %c0_20], %22 {strides = array<i32>} : memref<8x128xf32, #tpu.memory_space<vmem>>, vector<8x128xf32>,
    } else {
    }
    return
  }
  func.func @transform_0(%arg0: i32, %arg1: i32) -> (i32, i32) {
    %c0_i32 = arith.constant 0 : i32
    %c0_i32_0 = arith.constant 0 : i32
    return %arg0, %c0_i32 : i32, i32
  }
  func.func @transform_1(%arg0: i32, %arg1: i32) -> (i32, i32) {
    %c0_i32 = arith.constant 0 : i32
    %c0_i32_0 = arith.constant 0 : i32
    return %c0_i32, %arg1 : i32, i32
  }
  func.func @transform_2(%arg0: i32, %arg1: i32) -> (i32, i32) {
    %c0_i32 = arith.constant 0 : i32
    %c0_i32_0 = arith.constant 0 : i32
    return %c0_i32, %arg1 : i32, i32
  }
  func.func @transform_3(%arg0: i32, %arg1: i32) -> (i32, i32) {
    %c0_i32 = arith.constant 0 : i32
    %c0_i32_0 = arith.constant 0 : i32
    return %arg1, %c0_i32 : i32, i32
  }
  func.func @transform_4(%arg0: i32, %arg1: i32) -> (i32, i32) {
    %c0_i32 = arith.constant 0 : i32
    %c0_i32_0 = arith.constant 0 : i32
    %c0_i32_1 = arith.constant 0 : i32
    return %c0_i32, %c0_i32_0 : i32, i32
  }
  func.func @transform_5(%arg0: i32, %arg1: i32) -> (i32, i32) {
    %c0_i32 = arith.constant 0 : i32
    %c0_i32_0 = arith.constant 0 : i32
    return %arg0, %c0_i32 : i32, i32
  }
}

</mosaic_0001>

<llo_original>
// kernel: residual_block.1
$region0: #{residual_block.1}
  #allocation0 [shape = 'u32[]', space=smem, size = 0x4, offset = 0x4, fixed_abs, tag = 'smem constant byte address 0x4 - core index']
  #allocation1 [shape = 'u32[72,128]{1,0:T(1,128)}', space=vmem, size = 0x9000, scoped, tag = 'internal scratch']
  #allocation2 [shape = 'f32[8,128]{1,0:T(8,128)}', space=vmem, size = 0x1000, scoped, tag = 'scratch operand']
  %s0 = inlined_call_operand.vmem [shape: f32[8,128], index: 0, kind: input, shape index: {}]
  %s1 = inlined_call_operand.hbm [shape: f32[128,128], index: 1, kind: input, shape index: {}]
  %s2 = inlined_call_operand.vmem [shape: f32[1,128], index: 2, kind: input, shape index: {}]
  %s3 = inlined_call_operand.hbm [shape: f32[128,128], index: 3, kind: input, shape index: {}]
  %s4 = inlined_call_operand.vmem [shape: f32[1,128], index: 4, kind: input, shape index: {}]
  %s5 = inlined_call_operand.hbm [shape: f32[8,128], index: 5, kind: output, shape index: {}]
  %s6 = sld [smem:[#allocation0]]
  $region46: #{residual_block.1} parent=0
    _
  %s8 = ssub.s32 1, %s6
  %s9 = scalar_select 0, %s8, %s6
  $region1: #{residual_block.1} parent=0
    #allocation3 [shape = 'u8[65536]{0}', space=vmem, size = 0x10000, scoped, tag = 'input window, operand 1, single buffered']
    #allocation4 [shape = 's32[1]{0}', space=sflag, size = 0x4, scoped, tag = 'scoped memory for residual_block.1']
    #allocation5 [shape = 's32[1]{0}', space=sflag, size = 0x4, scoped, tag = 'scoped memory for residual_block.1']
    #allocation6 [shape = 'u8[65536]{0}', space=vmem, size = 0x10000, scoped, tag = 'input window, operand 3, single buffered']
    #allocation7 [shape = 's32[1]{0}', space=sflag, size = 0x4, scoped, tag = 'scoped memory for residual_block.1']
    #allocation8 [shape = 'u8[4096]{0}', space=vmem, size = 0x1000, scoped, tag = 'output window, operand 0, single buffered']
    %10 = vsyncpa [#allocation4], 0
    %11 = vsyncpa [#allocation7], 0
    %12 = vsyncpa [#allocation5], 0
    // Predicated region
    $region2: #{residual_block.1} parent=1 // pred_check
      _
    $region3: #{residual_block.1} parent=1 // pred_check_branch
      %14 = sbr.rel (0) target = $region5
    $region4: #{residual_block.1} parent=1 // pred_region
      _
    $region5: #{residual_block.1} parent=1 // pred_fallthru
      _
    // Predicated region
    $region6: #{residual_block.1} parent=1 // pred_check
      _
    $region7: #{residual_block.1} parent=1 // pred_check_branch
      %16 = sbr.rel (0) target = $region9
    $region8: #{residual_block.1} parent=1 // pred_region
      %18 = vsyncadd [#allocation4], 0
      %s19 = sshll.u32 %s1, 4
      %s20 = int_to_ptr.hbm [resolvable:$true] %s19
      %s21 = sshll.u32 [#allocation3], 4
      %s22 = int_to_ptr.vmem [resolvable:$true] %s21
      %27 = dma.hbm_to_vmem [thread:$0]  %s20, 2048, %s22, [#allocation4], 128, 128, 8
    $region9: #{residual_block.1} parent=1 // pred_fallthru
      _
    // Predicated region
    $region10: #{residual_block.1} parent=1 // pred_check
      _
    $region11: #{residual_block.1} parent=1 // pred_check_branch
      %29 = sbr.rel (0) target = $region13
    $region12: #{residual_block.1} parent=1 // pred_region
      _
    $region13: #{residual_block.1} parent=1 // pred_fallthru
      _
    // Predicated region
    $region14: #{residual_block.1} parent=1 // pred_check
      _
    $region15: #{residual_block.1} parent=1 // pred_check_branch
      %31 = sbr.rel (0) target = $region17
    $region16: #{residual_block.1} parent=1 // pred_region
      %33 = vsyncadd [#allocation7], 0
      %s34 = sshll.u32 %s3, 4
      %s35 = int_to_ptr.hbm [resolvable:$true] %s34
      %s36 = sshll.u32 [#allocation6], 4
      %s37 = int_to_ptr.vmem [resolvable:$true] %s36
      %42 = dma.hbm_to_vmem [thread:$0]  %s35, 2048, %s37, [#allocation7], 128, 128, 8
    $region17: #{residual_block.1} parent=1 // pred_fallthru
      _
    // Predicated region
    $region18: #{residual_block.1} parent=1 // pred_check
      _
    $region19: #{residual_block.1} parent=1 // pred_check_branch
      %44 = sbr.rel (0) target = $region21
    $region20: #{residual_block.1} parent=1 // pred_region
      _
    $region21: #{residual_block.1} parent=1 // pred_fallthru
      _
    // Predicated region
    $region22: #{residual_block.1} parent=1 // pred_check
      _
    $region23: #{residual_block.1} parent=1 // pred_check_branch
      %46 = sbr.rel (0) target = $region25
    $region24: #{residual_block.1} parent=1 // pred_region
      %48 = dma.done [#allocation4], 2048
    $region25: #{residual_block.1} parent=1 // pred_fallthru
      _
    // Predicated region
    $region26: #{residual_block.1} parent=1 // pred_check
      _
    $region27: #{residual_block.1} parent=1 // pred_check_branch
      %50 = sbr.rel (0) target = $region29
    $region28: #{residual_block.1} parent=1 // pred_region
      %52 = dma.done [#allocation7], 2048
    $region29: #{residual_block.1} parent=1 // pred_fallthru
      _
    %p53 = scmp.eq.s32.totalorder 0, 0
    // Predicated region
    $region30: #{residual_block.1} parent=1 // pred_check
      %p54 = pneg %p53
    $region31: #{residual_block.1} parent=1 // pred_check_branch
      %56 = sbr.rel (%p54) target = $region33
    $region32: #{residual_block.1} parent=1 // pred_region
      %v57 = vld [vmem:[%s0] sm:$0xff]
      %v58 = vld [vmem:[%s4] sm:$0x1]
      %v60 = vperm.slane %v58, 0
      %v62 = vadd.f32 %v57, %v60
      %63 = vst [vmem:[#allocation2] sm:$0xff] %v62
    $region33: #{residual_block.1} parent=1 // pred_fallthru
      _
    %v64 = vld [vmem:[%s0] sm:$0xff]
    %v65 = vld [vmem:[#allocation3] sm:$0xff]
    %v66 = vld [vmem:[#allocation3 + $0x8] sm:$0xff]
    %v67 = vld [vmem:[#allocation3 + $0x10] sm:$0xff]
    %v68 = vld [vmem:[#allocation3 + $0x18] sm:$0xff]
    %v69 = vld [vmem:[#allocation3 + $0x20] sm:$0xff]
    %v70 = vld [vmem:[#allocation3 + $0x28] sm:$0xff]
    %v71 = vld [vmem:[#allocation3 + $0x30] sm:$0xff]
    %v72 = vld [vmem:[#allocation3 + $0x38] sm:$0xff]
    %v73 = vld [vmem:[#allocation3 + $0x40] sm:$0xff]
    %v74 = vld [vmem:[#allocation3 + $0x48] sm:$0xff]
    %v75 = vld [vmem:[#allocation3 + $0x50] sm:$0xff]
    %v76 = vld [vmem:[#allocation3 + $0x58] sm:$0xff]
    %v77 = vld [vmem:[#allocation3 + $0x60] sm:$0xff]
    %v78 = vld [vmem:[#allocation3 + $0x68] sm:$0xff]
    %v79 = vld [vmem:[#allocation3 + $0x70] sm:$0xff]
    %v80 = vld [vmem:[#allocation3 + $0x78] sm:$0xff]
    %v81 = vld [vmem:[%s2] sm:$0x1]
    %v83 = vperm.slane %v81, 0
    %85 = vmatpush.msra.mxu0 %v80
    %86 = vmatpush.msra.mxu0 %v79
    %87 = vmatpush.msra.mxu0 %v78
    %88 = vmatpush.msra.mxu0 %v77
    %89 = vmatpush.msra.mxu0 %v76
    %90 = vmatpush.msra.mxu0 %v75
    %91 = vmatpush.msra.mxu0 %v74
    %92 = vmatpush.msra.mxu0 %v73
    %93 = vmatpush.msra.mxu0 %v72
    %94 = vmatpush.msra.mxu0 %v71
    %95 = vmatpush.msra.mxu0 %v70
    %96 = vmatpush.msra.mxu0 %v69
    %97 = vmatpush.msra.mxu0 %v68
    %98 = vmatpush.msra.mxu0 %v67
    %99 = vmatpush.msra.mxu0 %v66
    %100 = vmatpush.msra.mxu0 %v65
    %101 = vmatmul.f32.gmra.mxu0 %v64
    %v102 = vpop.f32.mrf.mxu0
    %v103 = vadd.f32 %v83, %v102
    %104 = vdwg.mxu0
    %vm105 = vcmp.ge.f32.partialorder %v103, 0.0
    %v106 = vmul.f32 %v103, 0.01
    %v107 = vsel %vm105, %v103, %v106
    %v108 = vld [vmem:[#allocation2] sm:$0xff]
    %v109 = vld [vmem:[#allocation6] sm:$0xff]
    %v110 = vld [vmem:[#allocation6 + $0x8] sm:$0xff]
    %v111 = vld [vmem:[#allocation6 + $0x10] sm:$0xff]
    %v112 = vld [vmem:[#allocation6 + $0x18] sm:$0xff]
    %v113 = vld [vmem:[#allocation6 + $0x20] sm:$0xff]
    %v114 = vld [vmem:[#allocation6 + $0x28] sm:$0xff]
    %v115 = vld [vmem:[#allocation6 + $0x30] sm:$0xff]
    %v116 = vld [vmem:[#allocation6 + $0x38] sm:$0xff]
    %v117 = vld [vmem:[#allocation6 + $0x40] sm:$0xff]
    %v118 = vld [vmem:[#allocation6 + $0x48] sm:$0xff]
    %v119 = vld [vmem:[#allocation6 + $0x50] sm:$0xff]
    %v120 = vld [vmem:[#allocation6 + $0x58] sm:$0xff]
    %v121 = vld [vmem:[#allocation6 + $0x60] sm:$0xff]
    %v122 = vld [vmem:[#allocation6 + $0x68] sm:$0xff]
    %v123 = vld [vmem:[#allocation6 + $0x70] sm:$0xff]
    %v124 = vld [vmem:[#allocation6 + $0x78] sm:$0xff]
    %125 = vmatpush.msra.mxu0 %v124
    %126 = vmatpush.msra.mxu0 %v123
    %127 = vmatpush.msra.mxu0 %v122
    %128 = vmatpush.msra.mxu0 %v121
    %129 = vmatpush.msra.mxu0 %v120
    %130 = vmatpush.msra.mxu0 %v119
    %131 = vmatpush.msra.mxu0 %v118
    %132 = vmatpush.msra.mxu0 %v117
    %133 = vmatpush.msra.mxu0 %v116
    %134 = vmatpush.msra.mxu0 %v115
    %135 = vmatpush.msra.mxu0 %v114
    %136 = vmatpush.msra.mxu0 %v113
    %137 = vmatpush.msra.mxu0 %v112
    %138 = vmatpush.msra.mxu0 %v111
    %139 = vmatpush.msra.mxu0 %v110
    %140 = vmatpush.msra.mxu0 %v109
    %141 = vmatmul.f32.gmra.mxu0 %v107
    %v142 = vpop.f32.mrf.mxu0
    %v143 = vadd.f32 0.0, %v142
    %144 = vdwg.mxu0
    %v145 = vadd.f32 %v108, %v143
    %146 = vst [vmem:[#allocation2] sm:$0xff] %v145
    // Predicated region
    $region34: #{residual_block.1} parent=1 // pred_check
      %p147 = pneg %p53
    $region35: #{residual_block.1} parent=1 // pred_check_branch
      %149 = sbr.rel (%p147) target = $region37
    $region36: #{residual_block.1} parent=1 // pred_region
      %v150 = vld [vmem:[#allocation2] sm:$0xff]
      %151 = vst [vmem:[#allocation8] sm:$0xff] %v150
    $region37: #{residual_block.1} parent=1 // pred_fallthru
      _
    // Predicated region
    $region38: #{residual_block.1} parent=1 // pred_check
      _
    $region39: #{residual_block.1} parent=1 // pred_check_branch
      %153 = sbr.rel (0) target = $region41
    $region40: #{residual_block.1} parent=1 // pred_region
      %155 = vsyncadd [#allocation5], 0
      %s157 = sshll.u32 [#allocation8], 4
      %s158 = int_to_ptr.vmem [resolvable:$true] %s157
      %s159 = sshll.u32 %s5, 4
      %s160 = int_to_ptr.hbm [resolvable:$true] %s159
      %162 = dma.vmem_to_hbm [thread:$0]  %s158, 128, %s160, [#allocation5]
    $region41: #{residual_block.1} parent=1 // pred_fallthru
      _
    // Predicated region
    $region42: #{residual_block.1} parent=1 // pred_check
      _
    $region43: #{residual_block.1} parent=1 // pred_check_branch
      %164 = sbr.rel (0) target = $region45
    $region44: #{residual_block.1} parent=1 // pred_region
      %166 = dma.done [#allocation5], 128
    $region45: #{residual_block.1} parent=1 // pred_fallthru
      _
    %167 = vsyncpa [#allocation4], 1
    %168 = vsyncpa [#allocation7], 1
    %169 = vsyncpa [#allocation5], 1

</llo_original>
